<compile_context>
chip_gen: v5e
topology: v5e:2x2
jax: 0.10.0
libtpu: 0.0.40
codegen_flags: <defaults>
</compile_context>

<pallas_src>
import math
import jax
import jax.numpy as jnp
from jax.experimental import pallas as pl
from jax.experimental.pallas import tpu as pltpu

H0_PAD = 128          # fc0 output (100) padded to a lane multiple
H1_PAD = 64           # fc1 output (50) padded to a clean sublane/MXU width
NUM_CLASSES = 10
DEFAULT_TILE_B = 256  # batch tile for real workloads (multiple of MXU M dim)


def mlp_logsoftmax_kernel(x_ref, w0_ref, b0_ref, w1_ref, b1_ref,
                          w2_ref, b2_ref, o_ref):
    # Cast the activation tile to bf16 for the MXU; accumulate in f32.
    x = x_ref[...].astype(jnp.bfloat16)

    # fc0 + relu  (bias add / relu in f32)
    h0 = jnp.dot(x, w0_ref[...], preferred_element_type=jnp.float32) + b0_ref[...]
    h0 = jnp.maximum(h0, 0.0)

    # fc1 + relu
    h1 = jnp.dot(h0.astype(jnp.bfloat16), w1_ref[...],
                 preferred_element_type=jnp.float32) + b1_ref[...]
    h1 = jnp.maximum(h1, 0.0)

    # fc2 (logits dim = 10, unpadded)
    logits = jnp.dot(h1.astype(jnp.bfloat16), w2_ref[...],
                     preferred_element_type=jnp.float32) + b2_ref[...]

    # numerically stable log_softmax along dim=1
    m = jnp.max(logits, axis=-1, keepdims=True)
    s = logits - m
    lse = jnp.log(jnp.sum(jnp.exp(s), axis=-1, keepdims=True))
    o_ref[...] = (s - lse).astype(o_ref.dtype)


def init_params(input_size, key):
    """Deterministic init mimicking nn.Linear default (uniform +/- 1/sqrt(fan_in)).
    Weights stored as (in, out) — i.e. pre-transposed vs PyTorch."""
    dims = [(input_size, 100), (100, 50), (50, 10)]
    params = []
    for (fan_in, fan_out) in dims:
        key, kw, kb = jax.random.split(key, 3)
        bound = 1.0 / math.sqrt(fan_in)
        w = jax.random.uniform(kw, (fan_in, fan_out), jnp.float32, -bound, bound)
        b = jax.random.uniform(kb, (1, fan_out), jnp.float32, -bound, bound)
        params += [w, b]
    return tuple(params)


def prepare_params(params):
    """One-time pad of ragged hidden dims to lane-friendly widths and cast of the
    weight matrices to bf16 (biases stay f32). Zero padding + ReLU(0)=0 keeps the
    hidden-layer results exact; the 10-wide logits dim is never padded."""
    w0, b0, w1, b1, w2, b2 = params
    w0p = jnp.pad(w0, ((0, 0), (0, H0_PAD - w0.shape[1]))).astype(jnp.bfloat16)
    b0p = jnp.pad(b0, ((0, 0), (0, H0_PAD - b0.shape[1]))).astype(jnp.float32)
    w1p = jnp.pad(w1, ((0, H0_PAD - w1.shape[0]),
                       (0, H1_PAD - w1.shape[1]))).astype(jnp.bfloat16)
    b1p = jnp.pad(b1, ((0, 0), (0, H1_PAD - b1.shape[1]))).astype(jnp.float32)
    w2p = jnp.pad(w2, ((0, H1_PAD - w2.shape[0]), (0, 0))).astype(jnp.bfloat16)
    b2p = b2.astype(jnp.float32)
    return (w0p, b0p, w1p, b1p, w2p, b2p)


def _round_up(a, m):
    return ((a + m - 1) // m) * m


def model_a_forward(x, prepared_params, tile_b=None):
    """x: any shape whose trailing elements flatten to input_size (x.view(-1, D))."""
    w0, b0, w1, b1, w2, b2 = prepared_params
    input_size = w0.shape[0]

    x2d = x.reshape(-1, input_size)          # dtype cast happens inside the kernel
    batch = x2d.shape[0]

    if tile_b is None:
        tile_b = min(DEFAULT_TILE_B, _round_up(batch, 8))
    tile_b = max(8, _round_up(tile_b, 8))
    padded = _round_up(batch, tile_b)
    if padded != batch:
        x2d = jnp.pad(x2d, ((0, padded - batch), (0, 0)))
    grid = (padded // tile_b,)

    resident = lambda shape: pl.BlockSpec(shape, lambda i: (0, 0))

    flops = 2 * padded * (input_size * H0_PAD + H0_PAD * H1_PAD
                          + H1_PAD * NUM_CLASSES)
    bytes_accessed = (int(x2d.size) * x2d.dtype.itemsize
                      + sum(int(a.size) * a.dtype.itemsize for a in prepared_params)
                      + padded * NUM_CLASSES * 4)
    cost = pl.CostEstimate(flops=flops,
                           transcendentals=padded * (NUM_CLASSES + 1),
                           bytes_accessed=bytes_accessed)

    out = pl.pallas_call(
        mlp_logsoftmax_kernel,
        out_shape=jax.ShapeDtypeStruct((padded, NUM_CLASSES), jnp.float32),
        grid=grid,
        in_specs=[
            pl.BlockSpec((tile_b, input_size), lambda i: (i, 0)),  # batch-tiled x
            resident(w0.shape), resident(b0.shape),                # weights resident
            resident(w1.shape), resident(b1.shape),
            resident(w2.shape), resident(b2.shape),
        ],
        out_specs=pl.BlockSpec((tile_b, NUM_CLASSES), lambda i: (i, 0)),
        compiler_params=pltpu.CompilerParams(
            dimension_semantics=("parallel",),      # megacore sharding on v7x
            vmem_limit_bytes=32 * 1024 * 1024,      # safe on v5e/v6e/v7x for this footprint
        ),
        cost_estimate=cost,
    )(x2d, w0, b0, w1, b1, w2, b2)

    return out[:batch] if padded != batch else out


def reference_forward(x, params):
    """Pure-JAX f32 reference of the PyTorch forward."""
    w0, b0, w1, b1, w2, b2 = params
    x2d = x.reshape(-1, w0.shape[0]).astype(jnp.float32)
    h0 = jax.nn.relu(x2d @ w0 + b0)
    h1 = jax.nn.relu(h0 @ w1 + b1)
    logits = h1 @ w2 + b2
    return jax.nn.log_softmax(logits, axis=1)


if __name__ == "__main__":
    key = jax.random.PRNGKey(0)
    input_size = 64                      # e.g. an 8x8 "image"
    batch = 24

    k_x, k_p = jax.random.split(key)
    x = jax.random.normal(k_x, (batch, 1, 8, 8), jnp.float32)   # x.view(-1, 64)
    params = init_params(input_size, k_p)
    prepared = prepare_params(params)

    # tile_b=8 exercises a multi-step batch grid at this toy size;
    # production sizes use the default 256-row tiles.
    out = model_a_forward(x, prepared, tile_b=8)
    out = jax.block_until_ready(out)

    ref = reference_forward(x, params)
    assert out.shape == (batch, NUM_CLASSES)
    # bf16 matmul inputs (f32 accumulate) vs pure-f32 reference -> looser tolerance
    assert jnp.allclose(out, ref, atol=5e-2, rtol=5e-2)
    # log_softmax rows must exponentiate-sum to 1
    assert jnp.allclose(jnp.sum(jnp.exp(out), axis=1), 1.0, atol=1e-3)

    print("KERNEL_OK")
</pallas_src>

<mosaic_0001>
module attributes {stable_mosaic.version = 11 : i64} {
  func.func @mlp_logsoftmax_kernel(%arg0: i32, %arg1: memref<8x64xf32, #tpu.memory_space<vmem>>, %arg2: memref<64x128xbf16, #tpu.memory_space<vmem>>, %arg3: memref<1x128xf32, #tpu.memory_space<vmem>>, %arg4: memref<128x64xbf16, #tpu.memory_space<vmem>>, %arg5: memref<1x64xf32, #tpu.memory_space<vmem>>, %arg6: memref<64x10xbf16, #tpu.memory_space<vmem>>, %arg7: memref<1x10xf32, #tpu.memory_space<vmem>>, %arg8: memref<8x10xf32, #tpu.memory_space<vmem>>) attributes {dimension_semantics = [#tpu.dimension_semantics<parallel>], iteration_bounds = array<i64: 3>, scalar_prefetch = 0 : i64, scratch_operands = 0 : i64, tpu.core_type = #tpu.core_type<tc>, window_params = [{transform_indices = @transform_0, window_bounds = array<i64: 8, 64>}, {pipeline_mode = #tpu.pipeline_mode<synchronous>, transform_indices = @transform_1, window_bounds = array<i64: 64, 128>}, {pipeline_mode = #tpu.pipeline_mode<synchronous>, transform_indices = @transform_2, window_bounds = array<i64: 1, 128>}, {pipeline_mode = #tpu.pipeline_mode<synchronous>, transform_indices = @transform_3, window_bounds = array<i64: 128, 64>}, {pipeline_mode = #tpu.pipeline_mode<synchronous>, transform_indices = @transform_4, window_bounds = array<i64: 1, 64>}, {pipeline_mode = #tpu.pipeline_mode<synchronous>, transform_indices = @transform_5, window_bounds = array<i64: 64, 10>}, {pipeline_mode = #tpu.pipeline_mode<synchronous>, transform_indices = @transform_6, window_bounds = array<i64: 1, 10>}, {transform_indices = @transform_7, window_bounds = array<i64: 8, 10>}]} {
    %c0 = arith.constant 0 : index
    %c0_0 = arith.constant 0 : index
    %0 = vector.load %arg1[%c0, %c0_0] : memref<8x64xf32, #tpu.memory_space<vmem>>, vector<8x64xf32>
    %1 = arith.truncf %0 : vector<8x64xf32> to vector<8x64xbf16>
    %c0_1 = arith.constant 0 : index
    %c0_2 = arith.constant 0 : index
    %2 = vector.load %arg2[%c0_1, %c0_2] : memref<64x128xbf16, #tpu.memory_space<vmem>>, vector<64x128xbf16>
    %cst = arith.constant dense<0.000000e+00> : vector<8x128xf32>
    %3 = tpu.matmul %1, %2, %cst {dimension_numbers = #tpu.dot_dimension_numbers<[1], [0], [0], [1], [0, 0, 1, 1], [], []>} : vector<8x64xbf16>, vector<64x128xbf16>, vector<8x128xf32> -> vector<8x128xf32>
    %c0_3 = arith.constant 0 : index
    %c0_4 = arith.constant 0 : index
    %4 = vector.load %arg3[%c0_3, %c0_4] : memref<1x128xf32, #tpu.memory_space<vmem>>, vector<1x128xf32>
    %5 = vector.broadcast %4 : vector<1x128xf32> to vector<8x128xf32>
    %6 = arith.addf %3, %5 : vector<8x128xf32>
    %cst_5 = arith.constant 0.000000e+00 : f32
    %7 = vector.broadcast %cst_5 : f32 to vector<8x128xf32>
    %8 = arith.maximumf %6, %7 : vector<8x128xf32>
    %9 = arith.truncf %8 : vector<8x128xf32> to vector<8x128xbf16>
    %c0_6 = arith.constant 0 : index
    %c0_7 = arith.constant 0 : index
    %10 = vector.load %arg4[%c0_6, %c0_7] : memref<128x64xbf16, #tpu.memory_space<vmem>>, vector<128x64xbf16>
    %cst_8 = arith.constant dense<0.000000e+00> : vector<8x64xf32>
    %11 = tpu.matmul %9, %10, %cst_8 {dimension_numbers = #tpu.dot_dimension_numbers<[1], [0], [0], [1], [0, 0, 1, 1], [], []>} : vector<8x128xbf16>, vector<128x64xbf16>, vector<8x64xf32> -> vector<8x64xf32>
    %c0_9 = arith.constant 0 : index
    %c0_10 = arith.constant 0 : index
    %12 = vector.load %arg5[%c0_9, %c0_10] : memref<1x64xf32, #tpu.memory_space<vmem>>, vector<1x64xf32>
    %13 = vector.broadcast %12 : vector<1x64xf32> to vector<8x64xf32>
    %14 = arith.addf %11, %13 : vector<8x64xf32>
    %cst_11 = arith.constant 0.000000e+00 : f32
    %15 = vector.broadcast %cst_11 : f32 to vector<8x64xf32>
    %16 = arith.maximumf %14, %15 : vector<8x64xf32>
    %17 = arith.truncf %16 : vector<8x64xf32> to vector<8x64xbf16>
    %c0_12 = arith.constant 0 : index
    %c0_13 = arith.constant 0 : index
    %18 = vector.load %arg6[%c0_12, %c0_13] : memref<64x10xbf16, #tpu.memory_space<vmem>>, vector<64x10xbf16>
    %cst_14 = arith.constant dense<0.000000e+00> : vector<8x10xf32>
    %19 = tpu.matmul %17, %18, %cst_14 {dimension_numbers = #tpu.dot_dimension_numbers<[1], [0], [0], [1], [0, 0, 1, 1], [], []>} : vector<8x64xbf16>, vector<64x10xbf16>, vector<8x10xf32> -> vector<8x10xf32>
    %c0_15 = arith.constant 0 : index
    %c0_16 = arith.constant 0 : index
    %20 = vector.load %arg7[%c0_15, %c0_16] : memref<1x10xf32, #tpu.memory_space<vmem>>, vector<1x10xf32>
    %21 = vector.broadcast %20 : vector<1x10xf32> to vector<8x10xf32>
    %22 = arith.addf %19, %21 : vector<8x10xf32>
    %cst_17 = arith.constant dense<0xFF800000> : vector<8xf32>
    %23 = vector.multi_reduction <maximumf>, %22, %cst_17 [1] : vector<8x10xf32> to vector<8xf32>
    %24 = vector.shape_cast %23 : vector<8xf32> to vector<8x1xf32>
    %25 = vector.broadcast %24 : vector<8x1xf32> to vector<8x10xf32>
    %26 = arith.subf %22, %25 : vector<8x10xf32>
    %27 = math.exp %26 : vector<8x10xf32>
    %cst_18 = arith.constant dense<0.000000e+00> : vector<8xf32>
    %28 = vector.multi_reduction <add>, %27, %cst_18 [1] : vector<8x10xf32> to vector<8xf32>
    %29 = vector.shape_cast %28 : vector<8xf32> to vector<8x1xf32>
    %30 = math.log %29 : vector<8x1xf32>
    %31 = vector.broadcast %30 : vector<8x1xf32> to vector<8x10xf32>
    %32 = arith.subf %26, %31 : vector<8x10xf32>
    %c0_19 = arith.constant 0 : index
    %c0_20 = arith.constant 0 : index
    %33 = vector.load %arg8[%c0_19, %c0_20] : memref<8x10xf32, #tpu.memory_space<vmem>>, vector<8x10xf32>
    tpu.vector_store %arg8[%c0_19, %c0_20], %32 {strides = array<i32>} : memref<8x10xf32, #tpu.memory_space<vmem>>, vector<8x10xf32>,
    return
  }
  func.func @transform_0(%arg0: i32) -> (i32, i32) {
    %c0_i32 = arith.constant 0 : i32
    %c0_i32_0 = arith.constant 0 : i32
    return %arg0, %c0_i32 : i32, i32
  }
  func.func @transform_1(%arg0: i32) -> (i32, i32) {
    %c0_i32 = arith.constant 0 : i32
    %c0_i32_0 = arith.constant 0 : i32
    %c0_i32_1 = arith.constant 0 : i32
    return %c0_i32, %c0_i32_0 : i32, i32
  }
  func.func @transform_2(%arg0: i32) -> (i32, i32) {
    %c0_i32 = arith.constant 0 : i32
    %c0_i32_0 = arith.constant 0 : i32
    %c0_i32_1 = arith.constant 0 : i32
    return %c0_i32, %c0_i32_0 : i32, i32
  }
  func.func @transform_3(%arg0: i32) -> (i32, i32) {
    %c0_i32 = arith.constant 0 : i32
    %c0_i32_0 = arith.constant 0 : i32
    %c0_i32_1 = arith.constant 0 : i32
    return %c0_i32, %c0_i32_0 : i32, i32
  }
  func.func @transform_4(%arg0: i32) -> (i32, i32) {
    %c0_i32 = arith.constant 0 : i32
    %c0_i32_0 = arith.constant 0 : i32
    %c0_i32_1 = arith.constant 0 : i32
    return %c0_i32, %c0_i32_0 : i32, i32
  }
  func.func @transform_5(%arg0: i32) -> (i32, i32) {
    %c0_i32 = arith.constant 0 : i32
    %c0_i32_0 = arith.constant 0 : i32
    %c0_i32_1 = arith.constant 0 : i32
    return %c0_i32, %c0_i32_0 : i32, i32
  }
  func.func @transform_6(%arg0: i32) -> (i32, i32) {
    %c0_i32 = arith.constant 0 : i32
    %c0_i32_0 = arith.constant 0 : i32
    %c0_i32_1 = arith.constant 0 : i32
    return %c0_i32, %c0_i32_0 : i32, i32
  }
  func.func @transform_7(%arg0: i32) -> (i32, i32) {
    %c0_i32 = arith.constant 0 : i32
    %c0_i32_0 = arith.constant 0 : i32
    return %arg0, %c0_i32 : i32, i32
  }
}

</mosaic_0001>

<llo_original>
// kernel: tpu_custom_call.1
$region0: #{tpu_custom_call.1}
  #allocation0 [shape = 'u32[]', space=smem, size = 0x4, offset = 0x4, fixed_abs, tag = 'smem constant byte address 0x4 - core index']
  #allocation1 [shape = 'u32[72,128]{1,0:T(1,128)}', space=vmem, size = 0x9000, scoped, tag = 'internal scratch']
  %s0 = inlined_call_operand.vmem [shape: f32[24,64], index: 0, kind: input, shape index: {}]
  %s1 = inlined_call_operand.vmem [shape: bf16[64,128], index: 1, kind: input, shape index: {}]
  %s2 = inlined_call_operand.vmem [shape: f32[1,128], index: 2, kind: input, shape index: {}]
  %s3 = inlined_call_operand.vmem [shape: bf16[128,64], index: 3, kind: input, shape index: {}]
  %s4 = inlined_call_operand.vmem [shape: f32[1,64], index: 4, kind: input, shape index: {}]
  %s5 = inlined_call_operand.vmem [shape: bf16[64,10], index: 5, kind: input, shape index: {}]
  %s6 = inlined_call_operand.vmem [shape: f32[1,10], index: 6, kind: input, shape index: {}]
  %s7 = inlined_call_operand.vmem [shape: f32[24,10], index: 7, kind: output, shape index: {}]
  %s8 = sld [smem:[#allocation0]]
  $region61: #{tpu_custom_call.1} parent=0
    _
  %s10 = ssub.s32 1, %s8
  %s11 = scalar_select 0, %s10, %s8
  loop: start=0, step=1, limit=5
  $region2: #{tpu_custom_call.1} parent=0 // loop_pre_header
    _
  $region3: #{tpu_custom_call.1} parent=0 // loop_header
    %s13 = sphi 0, %s17
    %p14 = scmp.ge.s32.totalorder %s13, 5
    %s23 = sphi 0, %s25
    %s26 = sphi 0, %s23
    %s27 = sphi 0, %s26
    %s43 = sphi 0, %s27
    %s47 = sphi 0, %s47
    %s49 = sphi 0, %s47
    %s50 = sphi 0, %s49
    %s64 = sphi 0, %s50
    %s68 = sphi 0, %s68
    %s70 = sphi 0, %s68
    %s71 = sphi 0, %s70
    %s85 = sphi 0, %s71
    %s89 = sphi 0, %s89
    %s91 = sphi 0, %s89
    %s92 = sphi 0, %s91
    %s106 = sphi 0, %s92
    %s110 = sphi 0, %s110
    %s112 = sphi 0, %s110
    %s113 = sphi 0, %s112
    %s127 = sphi 0, %s113
    %s131 = sphi 0, %s131
    %s133 = sphi 0, %s131
    %s134 = sphi 0, %s133
    %s148 = sphi 0, %s134
    %s152 = sphi 0, %s152
    %s154 = sphi 0, %s152
    %s155 = sphi 0, %s154
    %s169 = sphi 0, %s155
    %s175 = sphi 0, %s177
    %s178 = sphi 0, %s175
    %s179 = sphi 0, %s178
    %s195 = sphi 0, %s179
  $region4: #{tpu_custom_call.1} parent=0 // loop_header_branch
    %16 = sbr.rel (%p14) target = $region8
  $region5: #{tpu_custom_call.1} parent=0 // loop_body
    %s18 = ssub.s32 %s13, 1
    %s19 = ssub.s32 %s13, 2
    %s20 = sadd.s32 %s13, 1
    %s21 = ssub.s32 %s13, %s20
    %p22 = scmp.eq.s32.totalorder %s21, 0
    %s24 = sadd.s32 %s23, 1
    %s25 = scalar_select %p22, %s23, %s24
    %p28 = pneg %p22
    %p29 = scmp.eq.s32.totalorder %s13, 2
    %p30 = por %p28, %p29
    %p31 = scmp.ne.s32.totalorder %s23, %s26
    %p32 = scmp.eq.s32.totalorder %s13, 0
    %p33 = por %p31, %p32
    %p34 = scmp.ne.s32.totalorder %s23, %s26
    %p35 = scmp.eq.s32.totalorder %s18, 2
    %p36 = por %p34, %p35
    %p37 = scmp.ne.s32.totalorder %s26, %s27
    %p38 = scmp.eq.s32.totalorder %s18, 0
    %p39 = por %p37, %p38
    %p40 = scmp.ne.s32.totalorder %s26, %s27
    %p41 = scmp.eq.s32.totalorder %s19, 2
    %p42 = por %p40, %p41
    %p44 = scmp.ne.s32.totalorder %s27, %s43
    %p45 = scmp.eq.s32.totalorder %s19, 0
    %p46 = por %p44, %p45
    %s48 = sadd.s32 %s47, 1
    %p51 = scmp.eq.s32.totalorder %s13, 2
    %p52 = scmp.ne.s32.totalorder %s47, %s49
    %p53 = scmp.eq.s32.totalorder %s13, 0
    %p54 = por %p52, %p53
    %p55 = scmp.ne.s32.totalorder %s47, %s49
    %p56 = scmp.eq.s32.totalorder %s18, 2
    %p57 = por %p55, %p56
    %p58 = scmp.ne.s32.totalorder %s49, %s50
    %p59 = scmp.eq.s32.totalorder %s18, 0
    %p60 = por %p58, %p59
    %p61 = scmp.ne.s32.totalorder %s49, %s50
    %p62 = scmp.eq.s32.totalorder %s19, 2
    %p63 = por %p61, %p62
    %p65 = scmp.ne.s32.totalorder %s50, %s64
    %p66 = scmp.eq.s32.totalorder %s19, 0
    %p67 = por %p65, %p66
    %s69 = sadd.s32 %s68, 1
    %p72 = scmp.eq.s32.totalorder %s13, 2
    %p73 = scmp.ne.s32.totalorder %s68, %s70
    %p74 = scmp.eq.s32.totalorder %s13, 0
    %p75 = por %p73, %p74
    %p76 = scmp.ne.s32.totalorder %s68, %s70
    %p77 = scmp.eq.s32.totalorder %s18, 2
    %p78 = por %p76, %p77
    %p79 = scmp.ne.s32.totalorder %s70, %s71
    %p80 = scmp.eq.s32.totalorder %s18, 0
    %p81 = por %p79, %p80
    %p82 = scmp.ne.s32.totalorder %s70, %s71
    %p83 = scmp.eq.s32.totalorder %s19, 2
    %p84 = por %p82, %p83
    %p86 = scmp.ne.s32.totalorder %s71, %s85
    %p87 = scmp.eq.s32.totalorder %s19, 0
    %p88 = por %p86, %p87
    %s90 = sadd.s32 %s89, 1
    %p93 = scmp.eq.s32.totalorder %s13, 2
    %p94 = scmp.ne.s32.totalorder %s89, %s91
    %p95 = scmp.eq.s32.totalorder %s13, 0
    %p96 = por %p94, %p95
    %p97 = scmp.ne.s32.totalorder %s89, %s91
    %p98 = scmp.eq.s32.totalorder %s18, 2
    %p99 = por %p97, %p98
    %p100 = scmp.ne.s32.totalorder %s91, %s92
    %p101 = scmp.eq.s32.totalorder %s18, 0
    %p102 = por %p100, %p101
    %p103 = scmp.ne.s32.totalorder %s91, %s92
    %p104 = scmp.eq.s32.totalorder %s19, 2
    %p105 = por %p103, %p104
    %p107 = scmp.ne.s32.totalorder %s92, %s106
    %p108 = scmp.eq.s32.totalorder %s19, 0
    %p109 = por %p107, %p108
    %s111 = sadd.s32 %s110, 1
    %p114 = scmp.eq.s32.totalorder %s13, 2
    %p115 = scmp.ne.s32.totalorder %s110, %s112
    %p116 = scmp.eq.s32.totalorder %s13, 0
    %p117 = por %p115, %p116
    %p118 = scmp.ne.s32.totalorder %s110, %s112
    %p119 = scmp.eq.s32.totalorder %s18, 2
    %p120 = por %p118, %p119
    %p121 = scmp.ne.s32.totalorder %s112, %s113
    %p122 = scmp.eq.s32.totalorder %s18, 0
    %p123 = por %p121, %p122
    %p124 = scmp.ne.s32.totalorder %s112, %s113
    %p125 = scmp.eq.s32.totalorder %s19, 2
    %p126 = por %p124, %p125
    %p128 = scmp.ne.s32.totalorder %s113, %s127
    %p129 = scmp.eq.s32.totalorder %s19, 0
    %p130 = por %p128, %p129
    %s132 = sadd.s32 %s131, 1
    %p135 = scmp.eq.s32.totalorder %s13, 2
    %p136 = scmp.ne.s32.totalorder %s131, %s133
    %p137 = scmp.eq.s32.totalorder %s13, 0
    %p138 = por %p136, %p137
    %p139 = scmp.ne.s32.totalorder %s131, %s133
    %p140 = scmp.eq.s32.totalorder %s18, 2
    %p141 = por %p139, %p140
    %p142 = scmp.ne.s32.totalorder %s133, %s134
    %p143 = scmp.eq.s32.totalorder %s18, 0
    %p144 = por %p142, %p143
    %p145 = scmp.ne.s32.totalorder %s133, %s134
    %p146 = scmp.eq.s32.totalorder %s19, 2
    %p147 = por %p145, %p146
    %p149 = scmp.ne.s32.totalorder %s134, %s148
    %p150 = scmp.eq.s32.totalorder %s19, 0
    %p151 = por %p149, %p150
    %s153 = sadd.s32 %s152, 1
    %p156 = scmp.eq.s32.totalorder %s13, 2
    %p157 = scmp.ne.s32.totalorder %s152, %s154
    %p158 = scmp.eq.s32.totalorder %s13, 0
    %p159 = por %p157, %p158
    %p160 = scmp.ne.s32.totalorder %s152, %s154
    %p161 = scmp.eq.s32.totalorder %s18, 2
    %p162 = por %p160, %p161
    %p163 = scmp.ne.s32.totalorder %s154, %s155
    %p164 = scmp.eq.s32.totalorder %s18, 0
    %p165 = por %p163, %p164
    %p166 = scmp.ne.s32.totalorder %s154, %s155
    %p167 = scmp.eq.s32.totalorder %s19, 2
    %p168 = por %p166, %p167
    %p170 = scmp.ne.s32.totalorder %s155, %s169
    %p171 = scmp.eq.s32.totalorder %s19, 0
    %p172 = por %p170, %p171
    %s173 = ssub.s32 %s13, %s20
    %p174 = scmp.eq.s32.totalorder %s173, 0
    %s176 = sadd.s32 %s175, 1
    %s177 = scalar_select %p174, %s175, %s176
    %p180 = pneg %p174
    %p181 = scmp.eq.s32.totalorder %s13, 2
    %p182 = por %p180, %p181
    %p183 = scmp.ne.s32.totalorder %s175, %s178
    %p184 = scmp.eq.s32.totalorder %s13, 0
    %p185 = por %p183, %p184
    %p186 = scmp.ne.s32.totalorder %s175, %s178
    %p187 = scmp.eq.s32.totalorder %s18, 2
    %p188 = por %p186, %p187
    %p189 = scmp.ne.s32.totalorder %s178, %s179
    %p190 = scmp.eq.s32.totalorder %s18, 0
    %p191 = por %p189, %p190
    %p192 = scmp.ne.s32.totalorder %s178, %s179
    %p193 = scmp.eq.s32.totalorder %s19, 2
    %p194 = por %p192, %p193
    %p196 = scmp.ne.s32.totalorder %s179, %s195
    %p197 = scmp.eq.s32.totalorder %s19, 0
    %p198 = por %p196, %p197
    %p199 = scmp.le.s32.totalorder 1, %s13
    %p200 = scmp.lt.s32.totalorder %s13, 4
    %p201 = pnand %p199, %p200
    %p202 = pneg %p201
    // Predicated region
    $region9: #{tpu_custom_call.1} parent=5 // pred_check
      _
    $region10: #{tpu_custom_call.1} parent=5 // pred_check_branch
      %204 = sbr.rel (%p201) target = $region12
    $region11: #{tpu_custom_call.1} parent=5 // pred_region
      %s205 = ssub.s32 %s13, 1
      // Predicated region
      $region13: #{tpu_custom_call.1} parent=11 // pred_check
        %p206 = pneg %p60
      $region14: #{tpu_custom_call.1} parent=11 // pred_check_branch
        %208 = sbr.rel (%p206) target = $region16
      $region15: #{tpu_custom_call.1} parent=11 // pred_region
        _
      $region16: #{tpu_custom_call.1} parent=11 // pred_fallthru
        _
      // Predicated region
      $region17: #{tpu_custom_call.1} parent=11 // pred_check
        %p209 = pneg %p81
      $region18: #{tpu_custom_call.1} parent=11 // pred_check_branch
        %211 = sbr.rel (%p209) target = $region20
      $region19: #{tpu_custom_call.1} parent=11 // pred_region
        _
      $region20: #{tpu_custom_call.1} parent=11 // pred_fallthru
        _
      // Predicated region
      $region21: #{tpu_custom_call.1} parent=11 // pred_check
        %p212 = pneg %p102
      $region22: #{tpu_custom_call.1} parent=11 // pred_check_branch
        %214 = sbr.rel (%p212) target = $region24
      $region23: #{tpu_custom_call.1} parent=11 // pred_region
        _
      $region24: #{tpu_custom_call.1} parent=11 // pred_fallthru
        _
      // Predicated region
      $region25: #{tpu_custom_call.1} parent=11 // pred_check
        %p215 = pneg %p123
      $region26: #{tpu_custom_call.1} parent=11 // pred_check_branch
        %217 = sbr.rel (%p215) target = $region28
      $region27: #{tpu_custom_call.1} parent=11 // pred_region
        _
      $region28: #{tpu_custom_call.1} parent=11 // pred_fallthru
        _
      // Predicated region
      $region29: #{tpu_custom_call.1} parent=11 // pred_check
        %p218 = pneg %p144
      $region30: #{tpu_custom_call.1} parent=11 // pred_check_branch
        %220 = sbr.rel (%p218) target = $region32
      $region31: #{tpu_custom_call.1} parent=11 // pred_region
        _
      $region32: #{tpu_custom_call.1} parent=11 // pred_fallthru
        _
      // Predicated region
      $region33: #{tpu_custom_call.1} parent=11 // pred_check
        %p221 = pneg %p165
      $region34: #{tpu_custom_call.1} parent=11 // pred_check_branch
        %223 = sbr.rel (%p221) target = $region36
      $region35: #{tpu_custom_call.1} parent=11 // pred_region
        _
      $region36: #{tpu_custom_call.1} parent=11 // pred_fallthru
        _
    $region12: #{tpu_custom_call.1} parent=5 // pred_fallthru
      _
    %p224 = scmp.lt.s32.totalorder %s13, 3
    // Predicated region
    $region37: #{tpu_custom_call.1} parent=5 // pred_check
      %p225 = pneg %p224
    $region38: #{tpu_custom_call.1} parent=5 // pred_check_branch
      %227 = sbr.rel (%p225) target = $region40
    $region39: #{tpu_custom_call.1} parent=5 // pred_region
      // Predicated region
      $region41: #{tpu_custom_call.1} parent=39 // pred_check
        %p228 = pneg %p33
      $region42: #{tpu_custom_call.1} parent=39 // pred_check_branch
        %230 = sbr.rel (%p228) target = $region44
      $region43: #{tpu_custom_call.1} parent=39 // pred_region
        %p231 = scmp.lt.s32.totalorder %s13, 2
        %s232 = scalar_select %p231, %s13, 2
        %s233 = smul.addr %s232, 8
        %s234 = scalar_lea.vmem %s0, %s233
      $region44: #{tpu_custom_call.1} parent=39 // pred_fallthru
        _
    $region40: #{tpu_custom_call.1} parent=5 // pred_fallthru
      _
    %p235 = scmp.le.s32.totalorder 1, %s13
    %p236 = scmp.lt.s32.totalorder %s13, 4
    %p237 = pnand %p235, %p236
    %p238 = pneg %p237
    // Predicated region
    $region45: #{tpu_custom_call.1} parent=5 // pred_check
      _
    $region46: #{tpu_custom_call.1} parent=5 // pred_check_branch
      %240 = sbr.rel (%p237) target = $region48
    $region47: #{tpu_custom_call.1} parent=5 // pred_region
      %s241 = ssub.s32 %s13, 1
      %p242 = scmp.lt.s32.totalorder %s18, 2
      %s243 = scalar_select %p242, %s18, 2
      %s244 = smul.addr %s243, 8
      %s245 = scalar_lea.vmem %s0, %s244
      %p246 = pneg %p39
      %p247 = pneg %p36
      %p248 = pneg %p60
      %p249 = pneg %p57
      %p250 = pneg %p81
      %p251 = pneg %p78
      %p252 = pneg %p102
      %p253 = pneg %p99
      %p254 = pneg %p123
      %p255 = pneg %p120
      %p256 = pneg %p144
      %p257 = pneg %p141
      %p258 = pneg %p165
      %p259 = pneg %p162
      %p260 = pneg %p191
      %p261 = pneg %p188
      %p262 = scmp.lt.s32.totalorder %s18, 2
      %s263 = scalar_select %p262, %s18, 2
      %s264 = smul.addr %s263, 8
      %s265 = scalar_lea.vmem %s7, %s264
      %p266 = scmp.lt.s32.totalorder %s18, 2
      %s267 = scalar_select %p266, %s18, 2
      %s268 = smul.addr %s267, 8
      %s269 = scalar_lea.vmem %s0, %s268
      %p270 = scmp.lt.s32.totalorder %s18, 2
      %s271 = scalar_select %p270, %s18, 2
      %s272 = smul.addr %s271, 8
      %s273 = scalar_lea.vmem %s7, %s272
      %v275 = vld [vmem:[%s269] sm:$0xff]
      %v276 = vpack.c.bf16 %v275, %v275
      %v277 = vld [vmem:[%s1] sm:$0xf]
      %v278 = vld [vmem:[%s1 + $0x4] sm:$0xf]
      %v279 = vld [vmem:[%s1 + $0x8] sm:$0xf]
      %v280 = vld [vmem:[%s1 + $0xc] sm:$0xf]
      %v281 = vld [vmem:[%s1 + $0x10] sm:$0xf]
      %v282 = vld [vmem:[%s1 + $0x14] sm:$0xf]
      %v283 = vld [vmem:[%s1 + $0x18] sm:$0xf]
      %v284 = vld [vmem:[%s1 + $0x1c] sm:$0xf]
      %v285 = vld [vmem:[%s2] sm:$0x1]
      %v287 = vperm.slane %v285, 0
      %v297 = vunpack.c.l.b16 %v277
      %v298 = vunpack.c.l.b16 %v278
      %v299 = vunpack.c.l.b16 %v279
      %v300 = vunpack.c.l.b16 %v280
      %v301 = vunpack.c.l.b16 %v281
      %v302 = vunpack.c.l.b16 %v282
      %v303 = vunpack.c.l.b16 %v283
      %v304 = vunpack.c.l.b16 %v284
      %v305 = vpack.c.b16 %v298, %v297
      %v306 = vpack.c.b16 %v300, %v299
      %v307 = vpack.c.b16 %v302, %v301
      %v308 = vpack.c.b16 %v304, %v303
      %vm313 = vcmask 523264
      %v315 = vsel %vm313, %v276, 0
      %317 = vmatpush.bf16.msra.mxu0 0
      %318 = vmatpush.bf16.msra.mxu0 0
      %319 = vmatpush.bf16.msra.mxu0 0
      %320 = vmatpush.bf16.msra.mxu0 0
      %321 = vmatpush.bf16.msra.mxu0 %v308
      %322 = vmatpush.bf16.msra.mxu0 %v307
      %323 = vmatpush.bf16.msra.mxu0 %v306
      %324 = vmatpush.bf16.msra.mxu0 %v305
      %325 = vmatmul.bf16.gmra.mxu0 %v315
      %v326 = vpop.f32.mrf.mxu0
      %v327 = vadd.f32 %v287, %v326
      %v328 = vpop.f32.mrf.mxu0
      %329 = vdwg.mxu0
      %v330 = vmax.f32 %v327, 0.0
      %v331 = vpack.c.bf16 %v330, %v330
      %v332 = vld [vmem:[%s3] sm:$0xf]
      %v333 = vld [vmem:[%s3 + $0x4] sm:$0xf]
      %v334 = vld [vmem:[%s3 + $0x8] sm:$0xf]
      %v335 = vld [vmem:[%s3 + $0xc] sm:$0xf]
      %v336 = vld [vmem:[%s3 + $0x10] sm:$0xf]
      %v337 = vld [vmem:[%s3 + $0x14] sm:$0xf]
      %v338 = vld [vmem:[%s3 + $0x18] sm:$0xf]
      %v339 = vld [vmem:[%s3 + $0x1c] sm:$0xf]
      %v340 = vld [vmem:[%s3 + $0x20] sm:$0xf]
      %v341 = vld [vmem:[%s3 + $0x24] sm:$0xf]
      %v342 = vld [vmem:[%s3 + $0x28] sm:$0xf]
      %v343 = vld [vmem:[%s3 + $0x2c] sm:$0xf]
      %v344 = vld [vmem:[%s3 + $0x30] sm:$0xf]
      %v345 = vld [vmem:[%s3 + $0x34] sm:$0xf]
      %v346 = vld [vmem:[%s3 + $0x38] sm:$0xf]
      %v347 = vld [vmem:[%s3 + $0x3c] sm:$0xf]
      %v348 = vld [vmem:[%s4] sm:$0x1]
      %v350 = vperm.slane %v348, 0
      %v368 = vunpack.c.l.b16 %v332
      %v369 = vunpack.c.l.b16 %v333
      %v370 = vunpack.c.l.b16 %v334
      %v371 = vunpack.c.l.b16 %v335
      %v372 = vunpack.c.l.b16 %v336
      %v373 = vunpack.c.l.b16 %v337
      %v374 = vunpack.c.l.b16 %v338
      %v375 = vunpack.c.l.b16 %v339
      %v376 = vunpack.c.l.b16 %v340
      %v377 = vunpack.c.l.b16 %v341
      %v378 = vunpack.c.l.b16 %v342
      %v379 = vunpack.c.l.b16 %v343
      %v380 = vunpack.c.l.b16 %v344
      %v381 = vunpack.c.l.b16 %v345
      %v382 = vunpack.c.l.b16 %v346
      %v383 = vunpack.c.l.b16 %v347
      %v384 = vpack.c.b16 %v369, %v368
      %v385 = vpack.c.b16 %v371, %v370
      %v386 = vpack.c.b16 %v373, %v372
      %v387 = vpack.c.b16 %v375, %v374
      %v388 = vpack.c.b16 %v377, %v376
      %v389 = vpack.c.b16 %v379, %v378
      %v390 = vpack.c.b16 %v381, %v380
      %v391 = vpack.c.b16 %v383, %v382
      %400 = vmatpush.bf16.msra.mxu0 %v391
      %401 = vmatpush.bf16.msra.mxu0 %v390
      %402 = vmatpush.bf16.msra.mxu0 %v389
      %403 = vmatpush.bf16.msra.mxu0 %v388
      %404 = vmatpush.bf16.msra.mxu0 %v387
      %405 = vmatpush.bf16.msra.mxu0 %v386
      %406 = vmatpush.bf16.msra.mxu0 %v385
      %407 = vmatpush.bf16.msra.mxu0 %v384
      %408 = vmatmul.bf16.gmra.mxu0 %v331
      %v409 = vpop.f32.mrf.mxu0
      %v410 = vadd.f32 %v350, %v409
      %v411 = vpop.f32.mrf.mxu0
      %412 = vdwg.mxu0
      %v413 = vmax.f32 %v410, 0.0
      %v414 = vpack.c.bf16 %v413, %v413
      %v415 = vld [vmem:[%s5] sm:$0xf]
      %v416 = vld [vmem:[%s5 + $0x4] sm:$0xf]
      %v417 = vld [vmem:[%s5 + $0x8] sm:$0xf]
      %v418 = vld [vmem:[%s5 + $0xc] sm:$0xf]
      %v419 = vld [vmem:[%s5 + $0x10] sm:$0xf]
      %v420 = vld [vmem:[%s5 + $0x14] sm:$0xf]
      %v421 = vld [vmem:[%s5 + $0x18] sm:$0xf]
      %v422 = vld [vmem:[%s5 + $0x1c] sm:$0xf]
      %v423 = vld [vmem:[%s6] sm:$0x1]
      %v425 = vperm.slane %v423, 0
      %v435 = vunpack.c.l.b16 %v415
      %v436 = vunpack.c.l.b16 %v416
      %v437 = vunpack.c.l.b16 %v417
      %v438 = vunpack.c.l.b16 %v418
      %v439 = vunpack.c.l.b16 %v419
      %v440 = vunpack.c.l.b16 %v420
      %v441 = vunpack.c.l.b16 %v421
      %v442 = vunpack.c.l.b16 %v422
      %v443 = vpack.c.b16 %v436, %v435
      %v444 = vpack.c.b16 %v438, %v437
      %v445 = vpack.c.b16 %v440, %v439
      %v446 = vpack.c.b16 %v442, %v441
      %v452 = vsel %vm313, %v414, 0
      %454 = vmatpush.bf16.msra.mxu0 0
      %455 = vmatpush.bf16.msra.mxu0 0
      %456 = vmatpush.bf16.msra.mxu0 0
      %457 = vmatpush.bf16.msra.mxu0 0
      %458 = vmatpush.bf16.msra.mxu0 %v446
      %459 = vmatpush.bf16.msra.mxu0 %v445
      %460 = vmatpush.bf16.msra.mxu0 %v444
      %461 = vmatpush.bf16.msra.mxu0 %v443
      %462 = vmatmul.bf16.gmra.mxu0 %v452
      %v463 = vpop.f32.mrf.mxu0
      %v464 = vadd.f32 %v425, %v463
      %v465 = vpop.f32.mrf.mxu0
      %466 = vdwg.mxu0
      %vm467 = vcmask 80896
      %v468 = vsel %vm467, %v464, -inf
      %469 = vmax.xlane.f32.xlu0 %v468
      %v470 = vpop.xlane.xlu0 %469
      %v471 = vsub.f32 %v464, %v470
      %v472 = vmul.f32 %v471, 1.442695
      %v473 = vpow.pop %v472
      %v474 = vsel %vm467, %v473, 0.0
      %475 = vadd.xlane.f32.xlu0 %v474
      %v476 = vpop.xlane.xlu0 %475
      %v477 = vlog2.pop %v476
      %v478 = vmul.f32 %v477, 0.6931472
      %v479 = vsub.f32 %v471, %v478
      %480 = vst.msk [vmem:[%s273] sm:$0xff] %vm467, %v479
      %p481 = scmp.lt.s32.totalorder %s18, 2
      %s482 = scalar_select %p481, %s18, 2
      %s483 = smul.addr %s482, 8
      %s484 = scalar_lea.vmem %s7, %s483
      // Predicated region
      $region49: #{tpu_custom_call.1} parent=47 // pred_check
        %p485 = pneg %p188
      $region50: #{tpu_custom_call.1} parent=47 // pred_check_branch
        %487 = sbr.rel (%p485) target = $region52
      $region51: #{tpu_custom_call.1} parent=47 // pred_region
        _
      $region52: #{tpu_custom_call.1} parent=47 // pred_fallthru
        _
    $region48: #{tpu_custom_call.1} parent=5 // pred_fallthru
      _
    %p488 = scmp.le.s32.totalorder 2, %s13
    // Predicated region
    $region53: #{tpu_custom_call.1} parent=5 // pred_check
      %p489 = pneg %p488
    $region54: #{tpu_custom_call.1} parent=5 // pred_check_branch
      %491 = sbr.rel (%p489) target = $region56
    $region55: #{tpu_custom_call.1} parent=5 // pred_region
      %s492 = ssub.s32 %s13, 2
      // Predicated region
      $region57: #{tpu_custom_call.1} parent=55 // pred_check
        %p493 = pneg %p194
      $region58: #{tpu_custom_call.1} parent=55 // pred_check_branch
        %495 = sbr.rel (%p493) target = $region60
      $region59: #{tpu_custom_call.1} parent=55 // pred_region
        %p496 = scmp.lt.s32.totalorder %s19, 2
        %s497 = scalar_select %p496, %s19, 2
        %s498 = smul.addr %s497, 8
        %s499 = scalar_lea.vmem %s7, %s498
      $region60: #{tpu_custom_call.1} parent=55 // pred_fallthru
        _
    $region56: #{tpu_custom_call.1} parent=5 // pred_fallthru
      _
  $region6: #{tpu_custom_call.1} parent=0 // loop_footer
    %s17 = sadd.s32 1, %s13
  $region7: #{tpu_custom_call.1} parent=0 // loop_footer_branch
    %12 = sbr.rel target = $region3
  $region8: #{tpu_custom_call.1} parent=0 // loop_exit
    _

</llo_original>
